<compile_context>
chip_gen: v6e
topology: v6e:2x2x1
jax: 0.10.0
libtpu: 0.0.40
codegen_flags: <defaults>
</compile_context>

<pallas_src>
import functools

import jax
import jax.numpy as jnp
from jax import lax
from jax.experimental import pallas as pl
from jax.experimental.pallas import tpu as pltpu

_LANES = 128        # vreg lane width
_CHUNK = 2048       # in-kernel compute chunk (columns): small enough for vregs
_MAX_TILE = 262144  # per-step column cap (~32 MiB of double-buffered blocks)


def _round_up(x: int, m: int) -> int:
    return ((x + m - 1) // m) * m


def _linear_kernel(wb_ref, xT_ref, oT_ref, *, chunk: int):
    """y_T = W @ x_T + b, dense over all out_f rows, chunked along N.

    wb_ref : (in_f + 1, out_f, 1) VMEM f32
             wb_ref[k]    = weight[:, k, None]  (k-th input column of W)
             wb_ref[in_f] = bias[:, None]
    xT_ref : (in_f,  TILE) VMEM f32  (lane-dense along N)
    oT_ref : (out_f, TILE) VMEM f32  (lane-dense along N)
    """
    in_f, tile = xT_ref.shape
    n_chunks = tile // chunk                     # static; tile % chunk == 0

    # Tiny weight/bias columns: loaded once per grid step (5 vregs), reused by
    # the broadcasting multiplies below (lane-replicated operand).
    w_all = wb_ref[...]                          # (in_f + 1, out_f, 1)

    def body(c, carry):
        off = pl.multiple_of(c * chunk, _LANES)  # chunk is a multiple of 128
        xs = xT_ref[:, pl.ds(off, chunk)]        # (in_f, chunk)

        # Dense accumulation: one (out_f, chunk) slab holding every output row
        # at once.  (1, chunk) x-row broadcasts against (out_f, 1) weight
        # columns -> ~8 VALU ops / 128 output columns and a single store per
        # chunk (vs per-row scalar muls + 3 masked row stores before).
        # NOTE: if an xprof trace ever shows the sublane broadcasts saturating
        # the XLU, the strided broadcast load xT_ref[pl.ds(k, out_f, stride=0)]
        # moves them onto the (idle) load slots.
        y = w_all[in_f] + xs[0:1, :] * w_all[0]  # bias + x0 * W[:, 0]
        for k in range(1, in_f):                 # static unroll (in_f - 1 = 3)
            y = y + xs[k : k + 1, :] * w_all[k]

        oT_ref[:, pl.ds(off, chunk)] = y
        return carry

    lax.fori_loop(0, n_chunks, body, 0)


def _choose_tiles(n: int, tile_n: int) -> tuple[int, int]:
    """Pick (eff_tile, chunk): eff_tile multiple of 128 (and of chunk)."""
    tile_n = _round_up(max(_LANES, min(int(tile_n), _MAX_TILE)), _LANES)
    # Guarantee >=2 grid steps whenever n allows it, so ("parallel",) actually
    # uses both TensorCores on v7x.
    half = _round_up(pl.cdiv(n, 2), _LANES)
    eff = min(tile_n, half, _round_up(n, _LANES))
    if eff > _CHUNK:
        eff = _round_up(eff, _CHUNK)
        chunk = _CHUNK
    else:
        chunk = eff
    return eff, chunk


@functools.partial(jax.jit, static_argnames=("tile_n",))
def my_linear_t(xT: jax.Array, weight: jax.Array, bias: jax.Array,
                *, tile_n: int = 131072) -> jax.Array:
    """Core kernel: yT = W @ xT + b[:, None] in the lane-dense layout.

    xT: (in_features, N)  ->  (out_features, N), float32.
    Prefer this entry point when adjacent ops can keep the (features, N)
    layout — it avoids the two HBM transpose passes `my_linear` needs.
    """
    in_f, n = xT.shape
    out_f, in_f2 = weight.shape
    assert in_f == in_f2, "weight/in_features mismatch"
    assert bias.shape == (out_f,)
    assert out_f <= 8, "kernel assumes out_features fits one sublane tile"

    xT = xT.astype(jnp.float32)
    w = weight.astype(jnp.float32)
    b = bias.astype(jnp.float32)

    # (in_f + 1, out_f, 1): W columns + bias, in a shape the kernel can
    # lane-broadcast against (out_f, chunk) slabs.
    wb = jnp.concatenate([w.T[:, :, None], b[None, :, None]], axis=0)

    eff_tile, chunk = _choose_tiles(n, tile_n)
    grid = (pl.cdiv(n, eff_tile),)   # ragged last block: handled by Pallas,
                                     # no jnp.pad / extra HBM pass.

    # VMEM sizing: (in_f,T)/(out_f,T) blocks are 8-sublane padded in VMEM and
    # double-buffered -> ~128 B per column.  Cap well under v7x's 64 MiB.
    block_bytes = 2 * (2 * 8 * eff_tile * 4)
    vmem_limit = max(32 << 20, min(block_bytes + (8 << 20), 56 << 20))

    yT = pl.pallas_call(
        functools.partial(_linear_kernel, chunk=chunk),
        out_shape=jax.ShapeDtypeStruct((out_f, n), jnp.float32),
        grid=grid,
        in_specs=[
            # Tiny (5,3,1) weight/bias columns — resident in VMEM each step.
            pl.BlockSpec((in_f + 1, out_f, 1), lambda i: (0, 0, 0)),
            # x_T tile: (in_f, eff_tile); in_f equals the full dim, eff_tile is
            # a multiple of 128, so the (8,128) block constraint is met.
            # TODO(synk): bump to pipeline_mode=pl.Buffered(3) if a trace shows
            # exposed input DMA (cheap on v5e/v6e; re-check VMEM on v7x).
            pl.BlockSpec((in_f, eff_tile), lambda i: (0, i)),
        ],
        out_specs=pl.BlockSpec((out_f, eff_tile), lambda i: (0, i)),
        compiler_params=pltpu.CompilerParams(
            dimension_semantics=("parallel",),   # shard N across TCs (v7x)
            vmem_limit_bytes=vmem_limit,
        ),
        cost_estimate=pl.CostEstimate(
            flops=2 * n * in_f * out_f,
            transcendentals=0,
            bytes_accessed=4 * (n * (in_f + out_f) + wb.size),
        ),
    )(wb, xT)
    return yT


@functools.partial(jax.jit, static_argnames=("tile_n",))
def my_linear(x: jax.Array, weight: jax.Array, bias: jax.Array,
              *, tile_n: int = 131072) -> jax.Array:
    """Pallas equivalent of F.linear(x, weight, bias): (N, in_f) -> (N, out_f).

    The two .T ops are plain XLA layout passes around the kernel; use
    my_linear_t directly to avoid them when the surrounding graph can keep the
    transposed (features, N) layout.
    """
    return my_linear_t(x.T, weight, bias, tile_n=tile_n).T


if __name__ == "__main__":
    key = jax.random.PRNGKey(0)
    k_w, k_x1, k_x2, k_x3 = jax.random.split(key, 4)

    # Parameters matching nn.Parameter(t.randn(3, 4)) / t.zeros(3)
    weight = jax.random.normal(k_w, (3, 4), dtype=jnp.float32)
    bias = jnp.zeros((3,), dtype=jnp.float32)

    # Test 1: tiny batch — single (ragged) grid step, block wider than N.
    x1 = jax.random.normal(k_x1, (8, 4), dtype=jnp.float32)
    out1 = jax.block_until_ready(my_linear(x1, weight, bias))
    ref1 = x1 @ weight.T + bias[None, :]
    assert out1.shape == (8, 3)
    assert jnp.allclose(out1, ref1, atol=1e-5, rtol=1e-5)

    # Test 2: >=2 grid steps + ragged tail block (no host-side padding).
    x2 = jax.random.normal(k_x2, (300, 4), dtype=jnp.float32)
    out2 = jax.block_until_ready(my_linear(x2, weight, bias, tile_n=1024))
    ref2 = x2 @ weight.T + bias[None, :]
    assert out2.shape == (300, 3)
    assert jnp.allclose(out2, ref2, atol=1e-5, rtol=1e-5)

    # Test 3: transposed-layout entry point (no wrapper transposes) with a tile
    # larger than the compute chunk — exercises the in-kernel fori_loop.
    x3T = jax.random.normal(k_x3, (4, 9000), dtype=jnp.float32)  # (in_f, N)
    out3 = jax.block_until_ready(my_linear_t(x3T, weight, bias, tile_n=8192))
    ref3 = weight @ x3T + bias[:, None]
    assert out3.shape == (3, 9000)
    assert jnp.allclose(out3, ref3, atol=1e-4, rtol=1e-4)

    print("KERNEL_OK")
</pallas_src>

<mosaic_0001>
module attributes {stable_mosaic.version = 11 : i64} {
  func.func @_linear_kernel(%arg0: i32, %arg1: memref<5x3x1xf32, #tpu.memory_space<vmem>>, %arg2: memref<4x128xf32, #tpu.memory_space<vmem>>, %arg3: memref<3x128xf32, #tpu.memory_space<vmem>>) attributes {dimension_semantics = [#tpu.dimension_semantics<parallel>], iteration_bounds = array<i64: 1>, scalar_prefetch = 0 : i64, scratch_operands = 0 : i64, tpu.core_type = #tpu.core_type<tc>, window_params = [{pipeline_mode = #tpu.pipeline_mode<synchronous>, transform_indices = @transform_0, window_bounds = array<i64: 5, 3, 1>}, {transform_indices = @transform_1, window_bounds = array<i64: 4, 128>}, {transform_indices = @transform_2, window_bounds = array<i64: 3, 128>}]} {
    %c0 = arith.constant 0 : index
    %c0_0 = arith.constant 0 : index
    %c0_1 = arith.constant 0 : index
    %0 = vector.load %arg1[%c0, %c0_0, %c0_1] : memref<5x3x1xf32, #tpu.memory_space<vmem>>, vector<5x3x1xf32>
    %c0_i32 = arith.constant 0 : i32
    %c128_i32 = arith.constant 128 : i32
    %1 = arith.muli %c0_i32, %c128_i32 : i32
    %2 = tpu.assume_multiple %1, 128 : i32
    %c0_2 = arith.constant 0 : index
    %3 = arith.index_cast %2 : i32 to index
    %4 = vector.load %arg2[%c0_2, %3] : memref<4x128xf32, #tpu.memory_space<vmem>>, vector<4x128xf32>
    %5 = vector.extract_strided_slice %0 {offsets = [4, 0, 0], sizes = [1, 3, 1], strides = [1, 1, 1]} : vector<5x3x1xf32> to vector<1x3x1xf32>
    %6 = vector.shape_cast %5 : vector<1x3x1xf32> to vector<3x1xf32>
    %7 = vector.extract_strided_slice %4 {offsets = [0, 0], sizes = [1, 128], strides = [1, 1]} : vector<4x128xf32> to vector<1x128xf32>
    %8 = vector.extract_strided_slice %0 {offsets = [0, 0, 0], sizes = [1, 3, 1], strides = [1, 1, 1]} : vector<5x3x1xf32> to vector<1x3x1xf32>
    %9 = vector.shape_cast %8 : vector<1x3x1xf32> to vector<3x1xf32>
    %10 = vector.broadcast %7 : vector<1x128xf32> to vector<3x128xf32>
    %11 = vector.broadcast %9 : vector<3x1xf32> to vector<3x128xf32>
    %12 = arith.mulf %10, %11 : vector<3x128xf32>
    %13 = vector.broadcast %6 : vector<3x1xf32> to vector<3x128xf32>
    %14 = arith.addf %13, %12 : vector<3x128xf32>
    %15 = vector.extract_strided_slice %4 {offsets = [1, 0], sizes = [1, 128], strides = [1, 1]} : vector<4x128xf32> to vector<1x128xf32>
    %16 = vector.extract_strided_slice %0 {offsets = [1, 0, 0], sizes = [1, 3, 1], strides = [1, 1, 1]} : vector<5x3x1xf32> to vector<1x3x1xf32>
    %17 = vector.shape_cast %16 : vector<1x3x1xf32> to vector<3x1xf32>
    %18 = vector.broadcast %15 : vector<1x128xf32> to vector<3x128xf32>
    %19 = vector.broadcast %17 : vector<3x1xf32> to vector<3x128xf32>
    %20 = arith.mulf %18, %19 : vector<3x128xf32>
    %21 = arith.addf %14, %20 : vector<3x128xf32>
    %22 = vector.extract_strided_slice %4 {offsets = [2, 0], sizes = [1, 128], strides = [1, 1]} : vector<4x128xf32> to vector<1x128xf32>
    %23 = vector.extract_strided_slice %0 {offsets = [2, 0, 0], sizes = [1, 3, 1], strides = [1, 1, 1]} : vector<5x3x1xf32> to vector<1x3x1xf32>
    %24 = vector.shape_cast %23 : vector<1x3x1xf32> to vector<3x1xf32>
    %25 = vector.broadcast %22 : vector<1x128xf32> to vector<3x128xf32>
    %26 = vector.broadcast %24 : vector<3x1xf32> to vector<3x128xf32>
    %27 = arith.mulf %25, %26 : vector<3x128xf32>
    %28 = arith.addf %21, %27 : vector<3x128xf32>
    %29 = vector.extract_strided_slice %4 {offsets = [3, 0], sizes = [1, 128], strides = [1, 1]} : vector<4x128xf32> to vector<1x128xf32>
    %30 = vector.extract_strided_slice %0 {offsets = [3, 0, 0], sizes = [1, 3, 1], strides = [1, 1, 1]} : vector<5x3x1xf32> to vector<1x3x1xf32>
    %31 = vector.shape_cast %30 : vector<1x3x1xf32> to vector<3x1xf32>
    %32 = vector.broadcast %29 : vector<1x128xf32> to vector<3x128xf32>
    %33 = vector.broadcast %31 : vector<3x1xf32> to vector<3x128xf32>
    %34 = arith.mulf %32, %33 : vector<3x128xf32>
    %35 = arith.addf %28, %34 : vector<3x128xf32>
    %c0_3 = arith.constant 0 : index
    %36 = arith.index_cast %2 : i32 to index
    %37 = vector.load %arg3[%c0_3, %36] : memref<3x128xf32, #tpu.memory_space<vmem>>, vector<3x128xf32>
    tpu.vector_store %arg3[%c0_3, %36], %35 {strides = array<i32>} : memref<3x128xf32, #tpu.memory_space<vmem>>, vector<3x128xf32>,
    %c1_i32 = arith.constant 1 : i32
    return
  }
  func.func @transform_0(%arg0: i32) -> (i32, i32, i32) {
    %c0_i32 = arith.constant 0 : i32
    %c0_i32_0 = arith.constant 0 : i32
    %c0_i32_1 = arith.constant 0 : i32
    %c0_i32_2 = arith.constant 0 : i32
    return %c0_i32, %c0_i32_0, %c0_i32_1 : i32, i32, i32
  }
  func.func @transform_1(%arg0: i32) -> (i32, i32) {
    %c0_i32 = arith.constant 0 : i32
    %c0_i32_0 = arith.constant 0 : i32
    return %c0_i32, %arg0 : i32, i32
  }
  func.func @transform_2(%arg0: i32) -> (i32, i32) {
    %c0_i32 = arith.constant 0 : i32
    %c0_i32_0 = arith.constant 0 : i32
    return %c0_i32, %arg0 : i32, i32
  }
}

</mosaic_0001>

<llo_original>
// kernel: my_linear_t.1
$region0: #{my_linear_t.1}
  #allocation0 [shape = 'u32[]', space=smem, size = 0x4, offset = 0x4, fixed_abs, tag = 'smem constant byte address 0x4 - core index']
  #allocation1 [shape = 'u32[144,128]{1,0:T(1,128)}', space=vmem, size = 0x12000, scoped, tag = 'internal scratch']
  %s0 = inlined_call_operand.vmem [shape: f32[5,3,1], index: 0, kind: input, shape index: {}]
  %s1 = inlined_call_operand.vmem [shape: f32[4,8], index: 1, kind: input, shape index: {}]
  %s2 = inlined_call_operand.hbm [shape: f32[3,8], index: 2, kind: output, shape index: {}]
  %s3 = sld [smem:[#allocation0]]
  $region18: #{my_linear_t.1} parent=0
    _
  %s5 = ssub.s32 1, %s3
  %s6 = scalar_select 0, %s5, %s3
  $region1: #{my_linear_t.1} parent=0
    #allocation2 [shape = 'u8[2048]{0}', space=vmem, size = 0x800, scoped, tag = 'output window, operand 0, single buffered']
    #allocation3 [shape = 's32[1]{0}', space=sflag, size = 0x4, scoped, tag = 'scoped memory for my_linear_t.1']
    %7 = vsyncpa [#allocation3], 0
    // Predicated region
    $region2: #{my_linear_t.1} parent=1 // pred_check
      _
    $region3: #{my_linear_t.1} parent=1 // pred_check_branch
      %9 = sbr.rel (0) target = $region5
    $region4: #{my_linear_t.1} parent=1 // pred_region
      _
    $region5: #{my_linear_t.1} parent=1 // pred_fallthru
      _
    // Predicated region
    $region6: #{my_linear_t.1} parent=1 // pred_check
      _
    $region7: #{my_linear_t.1} parent=1 // pred_check_branch
      %11 = sbr.rel (0) target = $region9
    $region8: #{my_linear_t.1} parent=1 // pred_region
      _
    $region9: #{my_linear_t.1} parent=1 // pred_fallthru
      _
    %v12 = vld [vmem:[%s0] sm:$0x7]
    %v13 = vld [vmem:[%s0 + $0x4] sm:$0x7]
    %v14 = vld [vmem:[%s0 + $0x8] sm:$0x7]
    %v15 = vld [vmem:[%s0 + $0xc] sm:$0x7]
    %v16 = vld [vmem:[%s0 + $0x10] sm:$0x7]
    %v17 = vld [vmem:[%s1] sm:$0xf]
    %v18 = vlaneseq
    %v19 = vshrl.u32 %v18, 7
    %v20 = vsub.s32 0, %v19
    %v21 = vrot.slane %v17, %v20
    %23 = vset.pattern.permute.xlu0 0
    %24 = vperm.xlu0 %23, %v12
    %v25 = vpop.permute.xlu0 %24
    %v27 = vmul.f32 %v21, %v25
    %29 = vset.pattern.permute.xlu0 0
    %30 = vperm.xlu0 %29, %v16
    %v31 = vpop.permute.xlu0 %30
    %v33 = vadd.f32 %v31, %v27
    %v34 = vlaneseq
    %v35 = vshrl.u32 %v34, 7
    %v36 = vsub.s32 1, %v35
    %v37 = vrot.slane %v17, %v36
    %39 = vset.pattern.permute.xlu0 0
    %40 = vperm.xlu0 %39, %v13
    %v41 = vpop.permute.xlu0 %40
    %v43 = vmul.f32 %v37, %v41
    %v44 = vadd.f32 %v33, %v43
    %v45 = vlaneseq
    %v46 = vshrl.u32 %v45, 7
    %v47 = vsub.s32 2, %v46
    %v48 = vrot.slane %v17, %v47
    %50 = vset.pattern.permute.xlu0 0
    %51 = vperm.xlu0 %50, %v14
    %v52 = vpop.permute.xlu0 %51
    %v54 = vmul.f32 %v48, %v52
    %v55 = vadd.f32 %v44, %v54
    %v56 = vlaneseq
    %v57 = vshrl.u32 %v56, 7
    %v58 = vsub.s32 3, %v57
    %v59 = vrot.slane %v17, %v58
    %61 = vset.pattern.permute.xlu0 0
    %62 = vperm.xlu0 %61, %v15
    %v63 = vpop.permute.xlu0 %62
    %v65 = vmul.f32 %v59, %v63
    %v66 = vadd.f32 %v55, %v65
    %67 = vst [vmem:[#allocation2] sm:$0x7] %v66
    // Predicated region
    $region10: #{my_linear_t.1} parent=1 // pred_check
      _
    $region11: #{my_linear_t.1} parent=1 // pred_check_branch
      %69 = sbr.rel (0) target = $region13
    $region12: #{my_linear_t.1} parent=1 // pred_region
      %s71 = ssub.s32 64, 64
      %72 = vsyncadd [#allocation3], %s71
      %s74 = sshll.u32 [#allocation2], 4
      %s75 = int_to_ptr.vmem [resolvable:$true] %s74
      %77 = dma.vmem_to_hbm [thread:$0]  %s75, 64, %s2, [#allocation3]
    $region13: #{my_linear_t.1} parent=1 // pred_fallthru
      _
    // Predicated region
    $region14: #{my_linear_t.1} parent=1 // pred_check
      _
    $region15: #{my_linear_t.1} parent=1 // pred_check_branch
      %79 = sbr.rel (0) target = $region17
    $region16: #{my_linear_t.1} parent=1 // pred_region
      %80 = dma.done [#allocation3], 64
    $region17: #{my_linear_t.1} parent=1 // pred_fallthru
      _
    %81 = vsyncpa [#allocation3], 1

</llo_original>
